<compile_context>
chip_gen: v7x
topology: tpu7x:2x2x1
jax: 0.10.0
libtpu: 0.0.40
codegen_flags: <defaults>
</compile_context>

<pallas_src>
import functools
import math

import jax
import jax.numpy as jnp
from jax.experimental import pallas as pl
from jax.experimental.pallas import tpu as pltpu


def _round_up(x, m):
    return ((x + m - 1) // m) * m


# --------------------------------------------------------------- main: Y = A @ XW + b
def _metric_conv_kernel(sum_col, sqr_ref, vr_ref, vct2_ref, sqct_ref, m_ref,
                        xw_ref, b_ref, o_ref):
    k = pl.program_id(1)

    @pl.when(k == 0)
    def _init():
        o_ref[...] = jnp.zeros_like(o_ref)

    # gram2[i,j] = 2 * <v_i, v_j>; column copy is pre-transposed & pre-scaled in the
    # wrapper, so there is no in-kernel transpose and no 2.0* multiply.
    gram2 = jnp.dot(vr_ref[...], vct2_ref[...],
                    preferred_element_type=jnp.float32)              # (TM, TK) MXU
    d2 = jnp.maximum(sqr_ref[...] + sqct_ref[...] - gram2, 0.0)      # f32 (cancellation)
    # unnormalized metric-weighted adjacency tile; connectivity streamed as int8
    w_adj = m_ref[...].astype(jnp.float32) * jnp.exp(-d2)            # (TM, TK)
    # fused A-tile @ XW-tile; XW's all-ones column folds the row-sum into the MXU,
    # accumulated straight into the resident f32 output block.
    o_ref[...] += jnp.dot(w_adj.astype(jnp.bfloat16), xw_ref[...],
                          preferred_element_type=jnp.float32)

    @pl.when(k == pl.num_programs(1) - 1)
    def _finalize():
        rowsum = o_ref[:, sum_col:sum_col + 1]                       # from ones column
        inv = 1.0 / (rowsum + 1e-8)                                  # exact, once/tile
        o_ref[...] = o_ref[...] * inv + b_ref[...]


@functools.partial(jax.jit, static_argnames=("tm", "tk"))
def metric_conv(features, vertices, edges, faces, weights, bias, *, tm=512, tk=512):
    """Y = A (X W) + b with a Gaussian-distance pseudo-metric adjacency A."""
    n, c_in = features.shape
    c_out = weights.shape[1]

    # ---- tile sizing ------------------------------------------------------------
    n_small = _round_up(n, 32)                 # int8 sublane tile is 32
    if n_small <= 256:
        tm_ = tk_ = n_pad = n_small            # tiny mesh: one tile each way
    else:
        tm_ = min(tm, 512)
        tk_ = min(tk, 512)
        # v7x megacore: keep >= 2 row tiles so both TensorCores get work
        while tm_ > 256 and _round_up(n, tm_) // tm_ < 2:
            tm_ //= 2
        n_pad = _round_up(n, math.lcm(tm_, tk_))
    f_pad = _round_up(c_out + 1, 128)          # lane-dense output + ones column
    sum_col = c_out                            # row sums land in this column

    # ---- wrapper-side operand prep (all O(N) except the dense mask) --------------
    feats = features.astype(jnp.float32)
    w = weights.astype(jnp.float32)
    b_pad = jnp.zeros((1, f_pad), jnp.float32).at[0, :c_out].set(
        bias.reshape(-1).astype(jnp.float32))

    # XW computed once by XLA (cin is tiny), stored bf16, with an all-ones column at
    # index c_out so the A@XW matmul also produces the row sums (MXU has slack).
    xw = jnp.zeros((n_pad, f_pad), jnp.float32).at[:n, :c_out].set(feats @ w)
    xw = xw.at[:, sum_col].set(1.0).astype(jnp.bfloat16)

    # vertices: row copy (N,8); column copy pre-transposed and pre-scaled by 2 (8,N);
    # squared norms precomputed and streamed in both orientations (no in-kernel .T).
    v_pad = jnp.zeros((n_pad, 8), jnp.float32).at[:n, :vertices.shape[1]].set(
        vertices.astype(jnp.float32))
    vt2 = 2.0 * v_pad.T                                   # (8, n_pad)
    sq = jnp.sum(v_pad * v_pad, axis=-1)                  # (n_pad,)
    sq_r = sq.reshape(n_pad, 1)                           # (n_pad, 1)
    sq_ct = sq.reshape(1, n_pad)                          # (1, n_pad)

    # dense symmetric int8 connectivity (edges + faces + self-loops), ONE scatter.
    # TODO(synk): CSR + scalar prefetch for large meshes (skip all-zero tiles).
    e0, e1 = edges[:, 0], edges[:, 1]
    f0, f1, f2 = faces[:, 0], faces[:, 1], faces[:, 2]
    diag = jnp.arange(n, dtype=e0.dtype)
    rows = jnp.concatenate([e0, e1, f0, f1, f1, f2, f0, f2, diag])
    cols = jnp.concatenate([e1, e0, f1, f0, f2, f1, f2, f0, diag])
    mask = jnp.zeros((n_pad, n_pad), jnp.int8).at[rows, cols].set(jnp.int8(1))

    # ---- VMEM budget from actual (padded, double-buffered) buffer sizes ----------
    f32, bf16, i8, lane = 4, 2, 1, 128
    per_in = (tm_ * lane * f32          # sq_r   (tm,1), lane-padded
              + tm_ * lane * f32        # vr     (tm,8), lane-padded
              + 8 * tk_ * f32           # vT2    (8,tk)
              + 8 * tk_ * f32           # sq_cT  (1,tk), sublane-padded
              + tm_ * tk_ * i8          # mask   int8
              + tk_ * f_pad * bf16      # xw     bf16
              + 8 * f_pad * f32)        # bias
    per_out = tm_ * f_pad * f32
    vmem_limit = max(min(2 * (per_in + per_out) + (4 << 20), 64 << 20), 8 << 20)

    # ---- main kernel: rows tiled (parallel), reduction over column tiles of A ----
    out = pl.pallas_call(
        functools.partial(_metric_conv_kernel, sum_col),
        out_shape=jax.ShapeDtypeStruct((n_pad, f_pad), jnp.float32),
        grid_spec=pltpu.PrefetchScalarGridSpec(
            num_scalar_prefetch=0,
            grid=(n_pad // tm_, n_pad // tk_),
            in_specs=[pl.BlockSpec((tm_, 1), lambda i, k: (i, 0)),      # ||v_i||^2
                      pl.BlockSpec((tm_, 8), lambda i, k: (i, 0)),      # row vertices
                      pl.BlockSpec((8, tk_), lambda i, k: (0, k)),      # 2*col verts^T
                      pl.BlockSpec((1, tk_), lambda i, k: (0, k)),      # ||v_j||^2 ^T
                      pl.BlockSpec((tm_, tk_), lambda i, k: (i, k)),    # int8 mask tile
                      pl.BlockSpec((tk_, f_pad), lambda i, k: (k, 0)),  # XW tile (bf16)
                      pl.BlockSpec((1, f_pad), lambda i, k: (0, 0))],   # bias
            out_specs=pl.BlockSpec((tm_, f_pad), lambda i, k: (i, 0))),
        compiler_params=pltpu.CompilerParams(
            dimension_semantics=("parallel", "arbitrary"),
            vmem_limit_bytes=int(vmem_limit)),
    )(sq_r, v_pad, vt2, sq_ct, mask, xw, b_pad)

    return out[:n, :c_out]


def init_params(key, in_channels, out_feats):
    """Glorot init for W, uniform(-0.1, 0.1) for bias (matches reset_parameters)."""
    kw, kb = jax.random.split(key)
    limit = (6.0 / (in_channels + out_feats)) ** 0.5
    w = jax.random.uniform(kw, (in_channels, out_feats), jnp.float32, -limit, limit)
    b = jax.random.uniform(kb, (out_feats,), jnp.float32, -0.1, 0.1)
    return w, b


def _reference(features, vertices, edges, faces, weights, bias):
    """Pure-JAX reference of the same pseudo-metric forward (f32)."""
    n = features.shape[0]
    d2 = jnp.sum((vertices[:, None, :] - vertices[None, :, :]) ** 2, axis=-1)
    e0, e1 = edges[:, 0], edges[:, 1]
    f0, f1, f2 = faces[:, 0], faces[:, 1], faces[:, 2]
    diag = jnp.arange(n, dtype=e0.dtype)
    rows = jnp.concatenate([e0, e1, f0, f1, f1, f2, f0, f2, diag])
    cols = jnp.concatenate([e1, e0, f1, f0, f2, f1, f2, f0, diag])
    mask = jnp.zeros((n, n), jnp.float32).at[rows, cols].set(1.0)
    w_adj = mask * jnp.exp(-d2)
    a = w_adj / (jnp.sum(w_adj, axis=-1, keepdims=True) + 1e-8)
    return a @ (features @ weights) + bias


if __name__ == "__main__":
    key = jax.random.PRNGKey(0)
    k_feat, k_vert, k_edge, k_face, k_param = jax.random.split(key, 5)

    n_verts = 24
    in_channels = 4
    out_feats = 8
    n_edges = 48
    n_faces = 16

    features = jax.random.normal(k_feat, (n_verts, in_channels), jnp.float32)
    vertices = jax.random.normal(k_vert, (n_verts, 3), jnp.float32)
    edges = jax.random.randint(k_edge, (n_edges, 2), 0, n_verts, jnp.int32)
    faces = jax.random.randint(k_face, (n_faces, 3), 0, n_verts, jnp.int32)

    weights, bias = init_params(k_param, in_channels, out_feats)

    out = metric_conv(features, vertices, edges, faces, weights, bias)
    jax.block_until_ready(out)
    assert out.shape == (n_verts, out_feats)
    assert jnp.all(jnp.isfinite(out))

    ref = _reference(features, vertices, edges, faces, weights, bias)
    assert jnp.allclose(out, ref, rtol=5e-2, atol=5e-2), float(jnp.max(jnp.abs(out - ref)))

    print("KERNEL_OK")
</pallas_src>

<mosaic_0001>
module attributes {stable_mosaic.version = 11 : i64} {
  func.func @_metric_conv_kernel(%arg0: i32, %arg1: i32, %arg2: memref<32x1xf32, #tpu.memory_space<vmem>>, %arg3: memref<32x8xf32, #tpu.memory_space<vmem>>, %arg4: memref<8x32xf32, #tpu.memory_space<vmem>>, %arg5: memref<1x32xf32, #tpu.memory_space<vmem>>, %arg6: memref<32x32xi8, #tpu.memory_space<vmem>>, %arg7: memref<32x128xbf16, #tpu.memory_space<vmem>>, %arg8: memref<1x128xf32, #tpu.memory_space<vmem>>, %arg9: memref<32x128xf32, #tpu.memory_space<vmem>>) attributes {dimension_semantics = [#tpu.dimension_semantics<parallel>, #tpu.dimension_semantics<arbitrary>], iteration_bounds = array<i64: 1, 1>, scalar_prefetch = 0 : i64, scratch_operands = 0 : i64, tpu.core_type = #tpu.core_type<tc>, window_params = [{transform_indices = @transform_0, window_bounds = array<i64: 32, 1>}, {transform_indices = @transform_1, window_bounds = array<i64: 32, 8>}, {transform_indices = @transform_2, window_bounds = array<i64: 8, 32>}, {transform_indices = @transform_3, window_bounds = array<i64: 1, 32>}, {transform_indices = @transform_4, window_bounds = array<i64: 32, 32>}, {transform_indices = @transform_5, window_bounds = array<i64: 32, 128>}, {pipeline_mode = #tpu.pipeline_mode<synchronous>, transform_indices = @transform_6, window_bounds = array<i64: 1, 128>}, {transform_indices = @transform_7, window_bounds = array<i64: 32, 128>}]} {
    %c0_i32 = arith.constant 0 : i32
    %0 = arith.cmpi eq, %arg1, %c0_i32 : i32
    %1 = arith.extui %0 : i1 to i32
    %c0_i32_0 = arith.constant 0 : i32
    %2 = arith.cmpi ne, %1, %c0_i32_0 : i32
    scf.if %2 {
      %cst_21 = arith.constant 0.000000e+00 : f32
      %29 = vector.broadcast %cst_21 : f32 to vector<32x128xf32>
      %c0_22 = arith.constant 0 : index
      %c0_23 = arith.constant 0 : index
      %30 = vector.load %arg9[%c0_22, %c0_23] : memref<32x128xf32, #tpu.memory_space<vmem>>, vector<32x128xf32>
      tpu.vector_store %arg9[%c0_22, %c0_23], %29 {strides = array<i32>} : memref<32x128xf32, #tpu.memory_space<vmem>>, vector<32x128xf32>,
    } else {
    }
    %c0 = arith.constant 0 : index
    %c0_1 = arith.constant 0 : index
    %3 = vector.load %arg3[%c0, %c0_1] : memref<32x8xf32, #tpu.memory_space<vmem>>, vector<32x8xf32>
    %c0_2 = arith.constant 0 : index
    %c0_3 = arith.constant 0 : index
    %4 = vector.load %arg4[%c0_2, %c0_3] : memref<8x32xf32, #tpu.memory_space<vmem>>, vector<8x32xf32>
    %cst = arith.constant dense<0.000000e+00> : vector<32x32xf32>
    %5 = tpu.matmul %3, %4, %cst {dimension_numbers = #tpu.dot_dimension_numbers<[1], [0], [0], [1], [0, 0, 1, 1], [], []>} : vector<32x8xf32>, vector<8x32xf32>, vector<32x32xf32> -> vector<32x32xf32>
    %c0_4 = arith.constant 0 : index
    %c0_5 = arith.constant 0 : index
    %6 = vector.load %arg2[%c0_4, %c0_5] : memref<32x1xf32, #tpu.memory_space<vmem>>, vector<32x1xf32>
    %c0_6 = arith.constant 0 : index
    %c0_7 = arith.constant 0 : index
    %7 = vector.load %arg5[%c0_6, %c0_7] : memref<1x32xf32, #tpu.memory_space<vmem>>, vector<1x32xf32>
    %8 = vector.broadcast %6 : vector<32x1xf32> to vector<32x32xf32>
    %9 = vector.broadcast %7 : vector<1x32xf32> to vector<32x32xf32>
    %10 = arith.addf %8, %9 : vector<32x32xf32>
    %11 = arith.subf %10, %5 : vector<32x32xf32>
    %cst_8 = arith.constant 0.000000e+00 : f32
    %12 = vector.broadcast %cst_8 : f32 to vector<32x32xf32>
    %13 = arith.maximumf %11, %12 : vector<32x32xf32>
    %c0_9 = arith.constant 0 : index
    %c0_10 = arith.constant 0 : index
    %14 = vector.load %arg6[%c0_9, %c0_10] : memref<32x32xi8, #tpu.memory_space<vmem>>, vector<32x32xi8>
    %15 = arith.sitofp %14 : vector<32x32xi8> to vector<32x32xf32>
    %cst_11 = arith.constant 0.000000e+00 : f32
    %16 = vector.broadcast %cst_11 : f32 to vector<32x32xf32>
    %17 = arith.subf %16, %13 : vector<32x32xf32>
    %18 = math.exp %17 : vector<32x32xf32>
    %19 = arith.mulf %15, %18 : vector<32x32xf32>
    %c0_12 = arith.constant 0 : index
    %c0_13 = arith.constant 0 : index
    %20 = vector.load %arg9[%c0_12, %c0_13] : memref<32x128xf32, #tpu.memory_space<vmem>>, vector<32x128xf32>
    %21 = arith.truncf %19 : vector<32x32xf32> to vector<32x32xbf16>
    %c0_14 = arith.constant 0 : index
    %c0_15 = arith.constant 0 : index
    %22 = vector.load %arg7[%c0_14, %c0_15] : memref<32x128xbf16, #tpu.memory_space<vmem>>, vector<32x128xbf16>
    %cst_16 = arith.constant dense<0.000000e+00> : vector<32x128xf32>
    %23 = tpu.matmul %21, %22, %cst_16 {dimension_numbers = #tpu.dot_dimension_numbers<[1], [0], [0], [1], [0, 0, 1, 1], [], []>} : vector<32x32xbf16>, vector<32x128xbf16>, vector<32x128xf32> -> vector<32x128xf32>
    %24 = arith.addf %20, %23 : vector<32x128xf32>
    %c0_17 = arith.constant 0 : index
    %c0_18 = arith.constant 0 : index
    %25 = vector.load %arg9[%c0_17, %c0_18] : memref<32x128xf32, #tpu.memory_space<vmem>>, vector<32x128xf32>
    tpu.vector_store %arg9[%c0_17, %c0_18], %24 {strides = array<i32>} : memref<32x128xf32, #tpu.memory_space<vmem>>, vector<32x128xf32>,
    %c0_i32_19 = arith.constant 0 : i32
    %26 = arith.cmpi eq, %arg1, %c0_i32_19 : i32
    %27 = arith.extui %26 : i1 to i32
    %c0_i32_20 = arith.constant 0 : i32
    %28 = arith.cmpi ne, %27, %c0_i32_20 : i32
    scf.if %28 {
      %c0_21 = arith.constant 0 : index
      %c8 = arith.constant 8 : index
      %29 = vector.load %arg9[%c0_21, %c8] : memref<32x128xf32, #tpu.memory_space<vmem>>, vector<32x1xf32>
      %cst_22 = arith.constant 9.99999993E-9 : f32
      %30 = vector.broadcast %cst_22 : f32 to vector<32x1xf32>
      %31 = arith.addf %29, %30 : vector<32x1xf32>
      %cst_23 = arith.constant 1.000000e+00 : f32
      %32 = vector.broadcast %cst_23 : f32 to vector<32x1xf32>
      %33 = arith.divf %32, %31 : vector<32x1xf32>
      %c0_24 = arith.constant 0 : index
      %c0_25 = arith.constant 0 : index
      %34 = vector.load %arg9[%c0_24, %c0_25] : memref<32x128xf32, #tpu.memory_space<vmem>>, vector<32x128xf32>
      %35 = vector.broadcast %33 : vector<32x1xf32> to vector<32x128xf32>
      %36 = arith.mulf %34, %35 : vector<32x128xf32>
      %c0_26 = arith.constant 0 : index
      %c0_27 = arith.constant 0 : index
      %37 = vector.load %arg8[%c0_26, %c0_27] : memref<1x128xf32, #tpu.memory_space<vmem>>, vector<1x128xf32>
      %38 = vector.broadcast %37 : vector<1x128xf32> to vector<32x128xf32>
      %39 = arith.addf %36, %38 : vector<32x128xf32>
      %c0_28 = arith.constant 0 : index
      %c0_29 = arith.constant 0 : index
      %40 = vector.load %arg9[%c0_28, %c0_29] : memref<32x128xf32, #tpu.memory_space<vmem>>, vector<32x128xf32>
      tpu.vector_store %arg9[%c0_28, %c0_29], %39 {strides = array<i32>} : memref<32x128xf32, #tpu.memory_space<vmem>>, vector<32x128xf32>,
    } else {
    }
    return
  }
  func.func @transform_0(%arg0: i32, %arg1: i32) -> (i32, i32) {
    %c0_i32 = arith.constant 0 : i32
    %c0_i32_0 = arith.constant 0 : i32
    return %arg0, %c0_i32 : i32, i32
  }
  func.func @transform_1(%arg0: i32, %arg1: i32) -> (i32, i32) {
    %c0_i32 = arith.constant 0 : i32
    %c0_i32_0 = arith.constant 0 : i32
    return %arg0, %c0_i32 : i32, i32
  }
  func.func @transform_2(%arg0: i32, %arg1: i32) -> (i32, i32) {
    %c0_i32 = arith.constant 0 : i32
    %c0_i32_0 = arith.constant 0 : i32
    return %c0_i32, %arg1 : i32, i32
  }
  func.func @transform_3(%arg0: i32, %arg1: i32) -> (i32, i32) {
    %c0_i32 = arith.constant 0 : i32
    %c0_i32_0 = arith.constant 0 : i32
    return %c0_i32, %arg1 : i32, i32
  }
  func.func @transform_4(%arg0: i32, %arg1: i32) -> (i32, i32) {
    %c0_i32 = arith.constant 0 : i32
    return %arg0, %arg1 : i32, i32
  }
  func.func @transform_5(%arg0: i32, %arg1: i32) -> (i32, i32) {
    %c0_i32 = arith.constant 0 : i32
    %c0_i32_0 = arith.constant 0 : i32
    return %arg1, %c0_i32 : i32, i32
  }
  func.func @transform_6(%arg0: i32, %arg1: i32) -> (i32, i32) {
    %c0_i32 = arith.constant 0 : i32
    %c0_i32_0 = arith.constant 0 : i32
    %c0_i32_1 = arith.constant 0 : i32
    return %c0_i32, %c0_i32_0 : i32, i32
  }
  func.func @transform_7(%arg0: i32, %arg1: i32) -> (i32, i32) {
    %c0_i32 = arith.constant 0 : i32
    %c0_i32_0 = arith.constant 0 : i32
    return %arg0, %c0_i32 : i32, i32
  }
}

</mosaic_0001>

<llo_original>
// kernel: metric_conv.1
$region0: #{metric_conv.1}
  #allocation0 [shape = 'u32[]', space=smem, size = 0x4, offset = 0x4, fixed_abs, tag = 'smem constant byte address 0x4 - core index']
  #allocation1 [shape = 'u32[144,128]{1,0:T(1,128)}', space=vmem, size = 0x12000, scoped, tag = 'internal scratch']
  %s0 = inlined_call_operand.vmem [shape: f32[32,1], index: 0, kind: input, shape index: {}]
  %s1 = inlined_call_operand.vmem [shape: f32[32,8], index: 1, kind: input, shape index: {}]
  %s2 = inlined_call_operand.vmem [shape: f32[8,32], index: 2, kind: input, shape index: {}]
  %s3 = inlined_call_operand.vmem [shape: f32[1,32], index: 3, kind: input, shape index: {}]
  %s4 = inlined_call_operand.vmem [shape: s8[32,32], index: 4, kind: input, shape index: {}]
  %s5 = inlined_call_operand.vmem [shape: bf16[32,128], index: 5, kind: input, shape index: {}]
  %s6 = inlined_call_operand.vmem [shape: f32[1,128], index: 6, kind: input, shape index: {}]
  %s7 = inlined_call_operand.vmem [shape: f32[32,128], index: 7, kind: output, shape index: {}]
  %s8 = sld [smem:[#allocation0]]
  $region46: #{metric_conv.1} parent=0
    _
  %s10 = ssub.s32 1, %s8
  %s11 = scalar_select 0, %s10, %s8
  // Predicated region
  $region2: #{metric_conv.1} parent=0 // pred_check
    _
  $region3: #{metric_conv.1} parent=0 // pred_check_branch
    %13 = sbr.rel (0) target = $region5
  $region4: #{metric_conv.1} parent=0 // pred_region
    _
  $region5: #{metric_conv.1} parent=0 // pred_fallthru
    _
  // Predicated region
  $region6: #{metric_conv.1} parent=0 // pred_check
    _
  $region7: #{metric_conv.1} parent=0 // pred_check_branch
    %15 = sbr.rel (0) target = $region9
  $region8: #{metric_conv.1} parent=0 // pred_region
    _
  $region9: #{metric_conv.1} parent=0 // pred_fallthru
    _
  // Predicated region
  $region10: #{metric_conv.1} parent=0 // pred_check
    _
  $region11: #{metric_conv.1} parent=0 // pred_check_branch
    %17 = sbr.rel (0) target = $region13
  $region12: #{metric_conv.1} parent=0 // pred_region
    _
  $region13: #{metric_conv.1} parent=0 // pred_fallthru
    _
  // Predicated region
  $region14: #{metric_conv.1} parent=0 // pred_check
    _
  $region15: #{metric_conv.1} parent=0 // pred_check_branch
    %19 = sbr.rel (0) target = $region17
  $region16: #{metric_conv.1} parent=0 // pred_region
    _
  $region17: #{metric_conv.1} parent=0 // pred_fallthru
    _
  // Predicated region
  $region18: #{metric_conv.1} parent=0 // pred_check
    _
  $region19: #{metric_conv.1} parent=0 // pred_check_branch
    %21 = sbr.rel (0) target = $region21
  $region20: #{metric_conv.1} parent=0 // pred_region
    _
  $region21: #{metric_conv.1} parent=0 // pred_fallthru
    _
  // Predicated region
  $region22: #{metric_conv.1} parent=0 // pred_check
    _
  $region23: #{metric_conv.1} parent=0 // pred_check_branch
    %23 = sbr.rel (0) target = $region25
  $region24: #{metric_conv.1} parent=0 // pred_region
    _
  $region25: #{metric_conv.1} parent=0 // pred_fallthru
    _
  // Predicated region
  $region26: #{metric_conv.1} parent=0 // pred_check
    _
  $region27: #{metric_conv.1} parent=0 // pred_check_branch
    %25 = sbr.rel (0) target = $region29
  $region28: #{metric_conv.1} parent=0 // pred_region
    _
  $region29: #{metric_conv.1} parent=0 // pred_fallthru
    _
  %p27 = scmp.eq.s32.totalorder 0, 0
  // Predicated region
  $region30: #{metric_conv.1} parent=0 // pred_check
    %p28 = pneg %p27
  $region31: #{metric_conv.1} parent=0 // pred_check_branch
    %30 = sbr.rel (%p28) target = $region33
  $region32: #{metric_conv.1} parent=0 // pred_region
    %31 = vst [vmem:[%s7] sm:$0xff] 0.0
    %32 = vst [vmem:[%s7 + $0x8] sm:$0xff] 0.0
    %33 = vst [vmem:[%s7 + $0x10] sm:$0xff] 0.0
    %34 = vst [vmem:[%s7 + $0x18] sm:$0xff] 0.0
  $region33: #{metric_conv.1} parent=0 // pred_fallthru
    _
  %v35 = vld [vmem:[%s1] sm:$0xff]
  %v36 = vld [vmem:[%s1 + $0x8] sm:$0xff]
  %v37 = vld [vmem:[%s1 + $0x10] sm:$0xff]
  %v38 = vld [vmem:[%s1 + $0x18] sm:$0xff]
  %v39 = vld [vmem:[%s2] sm:$0xff]
  %vm40 = vcmask 64512
  %v42 = vsel %vm40, %v35, 0
  %v45 = vsel %vm40, %v36, 0
  %v48 = vsel %vm40, %v37, 0
  %v51 = vsel %vm40, %v38, 0
  %53 = vmatprep.subr.mxu0 0.0
  %54 = vmatpush1.msra.mxu0 %v39
  %55 = vmatprep.subr.mxu0 0.0
  %56 = vmatpush1.msra.mxu0 0.0
  %57 = vmatprep.subr.mxu0 0.0
  %58 = vmatpush1.msra.mxu0 0.0
  %59 = vmatprep.subr.mxu0 0.0
  %60 = vmatpush1.msra.mxu0 0.0
  %61 = vmatprep.subr.mxu0 0.0
  %62 = vmatpush1.msra.mxu0 0.0
  %63 = vmatprep.subr.mxu0 0.0
  %64 = vmatpush1.msra.mxu0 0.0
  %65 = vmatprep.subr.mxu0 0.0
  %66 = vmatpush1.msra.mxu0 0.0
  %67 = vmatprep.subr.mxu0 0.0
  %68 = vmatpush1.msra.mxu0 0.0
  %69 = vmatprep.subr.mxu0 0.0
  %70 = vmatpush1.msra.mxu0 0.0
  %71 = vmatprep.subr.mxu0 0.0
  %72 = vmatpush1.msra.mxu0 0.0
  %73 = vmatprep.subr.mxu0 0.0
  %74 = vmatpush1.msra.mxu0 0.0
  %75 = vmatprep.subr.mxu0 0.0
  %76 = vmatpush1.msra.mxu0 0.0
  %77 = vmatprep.subr.mxu0 0.0
  %78 = vmatpush1.msra.mxu0 0.0
  %79 = vmatprep.subr.mxu0 0.0
  %80 = vmatpush1.msra.mxu0 0.0
  %81 = vmatprep.subr.mxu0 0.0
  %82 = vmatpush1.msra.mxu0 0.0
  %83 = vmatprep.subr.mxu0 0.0
  %84 = vmatpush1.msra.mxu0 0.0
  %85 = vmatprep.subr.mxu0 0.0
  %86 = vmatpush1.msra.mxu0 0.0
  %87 = vmatprep.subr.mxu0 0.0
  %88 = vmatpush1.msra.mxu0 0.0
  %89 = vmatprep.subr.mxu0 0.0
  %90 = vmatpush1.msra.mxu0 0.0
  %91 = vmatprep.subr.mxu0 0.0
  %92 = vmatpush1.msra.mxu0 0.0
  %93 = vmatprep.subr.mxu0 0.0
  %94 = vmatpush1.msra.mxu0 0.0
  %95 = vmatprep.subr.mxu0 0.0
  %96 = vmatpush1.msra.mxu0 0.0
  %97 = vmatprep.subr.mxu0 0.0
  %98 = vmatpush1.msra.mxu0 0.0
  %99 = vmatprep.subr.mxu0 0.0
  %100 = vmatpush1.msra.mxu0 0.0
  %101 = vmatprep.subr.mxu0 0.0
  %102 = vmatpush1.msra.mxu0 0.0
  %103 = vmatprep.subr.mxu0 0.0
  %104 = vmatpush1.msra.mxu0 0.0
  %105 = vmatprep.subr.mxu0 0.0
  %106 = vmatpush1.msra.mxu0 0.0
  %107 = vmatprep.subr.mxu0 0.0
  %108 = vmatpush1.msra.mxu0 0.0
  %109 = vmatprep.subr.mxu0 0.0
  %110 = vmatpush1.msra.mxu0 0.0
  %111 = vmatprep.subr.mxu0 0.0
  %112 = vmatpush1.msra.mxu0 0.0
  %113 = vmatprep.subr.mxu0 0.0
  %114 = vmatpush1.msra.mxu0 0.0
  %115 = vmatprep.subr.mxu0 0.0
  %116 = vmatpush1.msra.mxu0 0.0
  %117 = vmatprep.mubr.f32.mxu0 0.0
  %118 = vmatmul.mubr.f32.gmra.mrb[0].mxu0 %v42
  %v119 = vpop.f32.mrb[0].mxu0
  %v120 = vadd.f32 0.0, %v119
  %v121 = vpop.f32.mrb[0].mxu0
  %122 = vmatprep.mubr.f32.mxu0 0.0
  %123 = vmatmul.mubr.f32.gmra.mrb[0].mxu0 %v45
  %v124 = vpop.f32.mrb[0].mxu0
  %v125 = vadd.f32 0.0, %v124
  %v126 = vpop.f32.mrb[0].mxu0
  %127 = vmatprep.mubr.f32.mxu0 0.0
  %128 = vmatmul.mubr.f32.gmra.mrb[0].mxu0 %v48
  %v129 = vpop.f32.mrb[0].mxu0
  %v130 = vadd.f32 0.0, %v129
  %v131 = vpop.f32.mrb[0].mxu0
  %132 = vmatprep.mubr.f32.mxu0 0.0
  %133 = vmatmul.mubr.f32.gmra.mrb[0].mxu0 %v51
  %v134 = vpop.f32.mrb[0].mxu0
  %v135 = vadd.f32 0.0, %v134
  %v136 = vpop.f32.mrb[0].mxu0
  %137 = vdwg.mxu0
  %v138 = vld [vmem:[%s0] sm:$0xff]
  %v139 = vld [vmem:[%s0 + $0x8] sm:$0xff]
  %v140 = vld [vmem:[%s0 + $0x10] sm:$0xff]
  %v141 = vld [vmem:[%s0 + $0x18] sm:$0xff]
  %v142 = vld [vmem:[%s3] sm:$0x1]
  %144 = vset.pattern.permute.xlu0 0
  %145 = vperm.xlu0 %144, %v138
  %v146 = vpop.permute.xlu0 %145
  %149 = vset.pattern.permute.xlu0 0
  %150 = vperm.xlu0 %149, %v139
  %v151 = vpop.permute.xlu0 %150
  %154 = vset.pattern.permute.xlu0 0
  %155 = vperm.xlu0 %154, %v140
  %v156 = vpop.permute.xlu0 %155
  %159 = vset.pattern.permute.xlu0 0
  %160 = vperm.xlu0 %159, %v141
  %v161 = vpop.permute.xlu0 %160
  %v164 = vlaneseq
  %v165 = vshrl.u32 %v164, 7
  %v166 = vsub.s32 0, %v165
  %v167 = vrot.slane %v142, %v166
  %v169 = vadd.f32 %v146, %v167
  %v170 = vadd.f32 %v151, %v167
  %v171 = vadd.f32 %v156, %v167
  %v172 = vadd.f32 %v161, %v167
  %v173 = vsub.f32 %v169, %v120
  %v174 = vsub.f32 %v170, %v125
  %v175 = vsub.f32 %v171, %v130
  %v176 = vsub.f32 %v172, %v135
  %v177 = vmax.f32 %v173, 0.0
  %v178 = vmax.f32 %v174, 0.0
  %v179 = vmax.f32 %v175, 0.0
  %v180 = vmax.f32 %v176, 0.0
  %v181 = vld [vmem:[%s4] sm:$0x3]
  %v182 = vld [vmem:[%s4 + $0x2] sm:$0x3]
  %v183 = vld [vmem:[%s4 + $0x4] sm:$0x3]
  %v184 = vld [vmem:[%s4 + $0x6] sm:$0x3]
  %v185 = vunpack.c.0.s8 %v181
  %v186 = vunpack.c.0.s8 %v182
  %v187 = vunpack.c.0.s8 %v183
  %v188 = vunpack.c.0.s8 %v184
  %v189 = vcvt.s32.f32 %v185
  %v190 = vcvt.s32.f32 %v186
  %v191 = vcvt.s32.f32 %v187
  %v192 = vcvt.s32.f32 %v188
  %v193 = vsub.f32 0.0, %v177
  %v194 = vsub.f32 0.0, %v178
  %v195 = vsub.f32 0.0, %v179
  %v196 = vsub.f32 0.0, %v180
  %v197 = vmul.f32 %v193, 1.442695
  %v198 = vpow.pop %v197
  %v199 = vmul.f32 %v194, 1.442695
  %v200 = vpow.pop %v199
  %v201 = vmul.f32 %v195, 1.442695
  %v202 = vpow.pop %v201
  %v203 = vmul.f32 %v196, 1.442695
  %v204 = vpow.pop %v203
  %v205 = vmul.f32 %v189, %v198
  %v206 = vmul.f32 %v190, %v200
  %v207 = vmul.f32 %v191, %v202
  %v208 = vmul.f32 %v192, %v204
  %v209 = vld [vmem:[%s7] sm:$0xff]
  %v210 = vld [vmem:[%s7 + $0x8] sm:$0xff]
  %v211 = vld [vmem:[%s7 + $0x10] sm:$0xff]
  %v212 = vld [vmem:[%s7 + $0x18] sm:$0xff]
  %v213 = vpack.c.bf16 %v206, %v205
  %v214 = vpack.c.bf16 %v208, %v207
  %v215 = vld [vmem:[%s5] sm:$0xf]
  %v216 = vld [vmem:[%s5 + $0x4] sm:$0xf]
  %v217 = vld [vmem:[%s5 + $0x8] sm:$0xf]
  %v218 = vld [vmem:[%s5 + $0xc] sm:$0xf]
  %v223 = vunpack.c.l.b16 %v215
  %v224 = vunpack.c.l.b16 %v216
  %v225 = vunpack.c.l.b16 %v217
  %v226 = vunpack.c.l.b16 %v218
  %v227 = vpack.c.b16 %v224, %v223
  %v228 = vpack.c.b16 %v226, %v225
  %vm231 = vcmask 261120
  %v233 = vsel %vm231, %v213, 0
  %v236 = vsel %vm231, %v214, 0
  %238 = vmatprep.subr.bf16.mxu0 0
  %239 = vmatpush1.bf16.msra.mxu0 %v227
  %240 = vmatprep.subr.bf16.mxu0 0
  %241 = vmatpush1.bf16.msra.mxu0 %v228
  %242 = vmatprep.subr.bf16.mxu0 0
  %243 = vmatpush1.bf16.msra.mxu0 0
  %244 = vmatprep.subr.bf16.mxu0 0
  %245 = vmatpush1.bf16.msra.mxu0 0
  %246 = vmatprep.subr.bf16.mxu0 0
  %247 = vmatpush1.bf16.msra.mxu0 0
  %248 = vmatprep.subr.bf16.mxu0 0
  %249 = vmatpush1.bf16.msra.mxu0 0
  %250 = vmatprep.subr.bf16.mxu0 0
  %251 = vmatpush1.bf16.msra.mxu0 0
  %252 = vmatprep.subr.bf16.mxu0 0
  %253 = vmatpush1.bf16.msra.mxu0 0
  %254 = vmatprep.subr.bf16.mxu0 0
  %255 = vmatpush1.bf16.msra.mxu0 0
  %256 = vmatprep.subr.bf16.mxu0 0
  %257 = vmatpush1.bf16.msra.mxu0 0
  %258 = vmatprep.subr.bf16.mxu0 0
  %259 = vmatpush1.bf16.msra.mxu0 0
  %260 = vmatprep.subr.bf16.mxu0 0
  %261 = vmatpush1.bf16.msra.mxu0 0
  %262 = vmatprep.subr.bf16.mxu0 0
  %263 = vmatpush1.bf16.msra.mxu0 0
  %264 = vmatprep.subr.bf16.mxu0 0
  %265 = vmatpush1.bf16.msra.mxu0 0
  %266 = vmatprep.subr.bf16.mxu0 0
  %267 = vmatpush1.bf16.msra.mxu0 0
  %268 = vmatprep.subr.bf16.mxu0 0
  %269 = vmatpush1.bf16.msra.mxu0 0
  %270 = vmatprep.mubr.bf16.mxu0 0
  %271 = vmatmul.mubr.bf16.gmra.mrb[0].mxu0 %v233
  %v272 = vpop.f32.mrb[0].mxu0
  %v273 = vadd.f32 0.0, %v272
  %v274 = vpop.f32.mrb[0].mxu0
  %v275 = vpop.f32.mrb[0].mxu0
  %v276 = vadd.f32 0.0, %v275
  %v277 = vpop.f32.mrb[0].mxu0
  %278 = vmatprep.mubr.bf16.mxu0 0
  %279 = vmatmul.mubr.bf16.gmra.mrb[0].mxu0 %v236
  %v280 = vpop.f32.mrb[0].mxu0
  %v281 = vadd.f32 0.0, %v280
  %v282 = vpop.f32.mrb[0].mxu0
  %v283 = vpop.f32.mrb[0].mxu0
  %v284 = vadd.f32 0.0, %v283
  %v285 = vpop.f32.mrb[0].mxu0
  %286 = vdwg.mxu0
  %v287 = vadd.f32 %v209, %v273
  %v288 = vadd.f32 %v210, %v276
  %v289 = vadd.f32 %v211, %v281
  %v290 = vadd.f32 %v212, %v284
  %291 = vst [vmem:[%s7] sm:$0xff] %v287
  %292 = vst [vmem:[%s7 + $0x8] sm:$0xff] %v288
  %293 = vst [vmem:[%s7 + $0x10] sm:$0xff] %v289
  %294 = vst [vmem:[%s7 + $0x18] sm:$0xff] %v290
  // Predicated region
  $region34: #{metric_conv.1} parent=0 // pred_check
    %p295 = pneg %p27
  $region35: #{metric_conv.1} parent=0 // pred_check_branch
    %297 = sbr.rel (%p295) target = $region37
  $region36: #{metric_conv.1} parent=0 // pred_region
    %v298 = vld [vmem:[%s7] sm:$0xff]
    %v299 = vld [vmem:[%s7 + $0x8] sm:$0xff]
    %v300 = vld [vmem:[%s7 + $0x10] sm:$0xff]
    %v301 = vld [vmem:[%s7 + $0x18] sm:$0xff]
    %v302 = vadd.f32 %v298, 1e-08
    %v303 = vadd.f32 %v299, 1e-08
    %v304 = vadd.f32 %v300, 1e-08
    %v305 = vadd.f32 %v301, 1e-08
    %v306 = vrcp.pop %v302
    %v307 = vmul.f32 1.0, %v306
    %v308 = vrcp.pop %v303
    %v309 = vmul.f32 1.0, %v308
    %v310 = vrcp.pop %v304
    %v311 = vmul.f32 1.0, %v310
    %v312 = vrcp.pop %v305
    %v313 = vmul.f32 1.0, %v312
    %315 = vset.pattern.permute.xlu0 8
    %316 = vperm.xlu0 %315, %v307
    %v317 = vpop.permute.xlu0 %316
    %320 = vset.pattern.permute.xlu0 8
    %321 = vperm.xlu0 %320, %v309
    %v322 = vpop.permute.xlu0 %321
    %325 = vset.pattern.permute.xlu0 8
    %326 = vperm.xlu0 %325, %v311
    %v327 = vpop.permute.xlu0 %326
    %330 = vset.pattern.permute.xlu0 8
    %331 = vperm.xlu0 %330, %v313
    %v332 = vpop.permute.xlu0 %331
    %v334 = vmul.f32 %v298, %v317
    %v335 = vmul.f32 %v299, %v322
    %v336 = vmul.f32 %v300, %v327
    %v337 = vmul.f32 %v301, %v332
    %v338 = vld [vmem:[%s6] sm:$0x1]
    %v340 = vlaneseq
    %v341 = vshrl.u32 %v340, 7
    %v342 = vsub.s32 0, %v341
    %v343 = vrot.slane %v338, %v342
    %v345 = vadd.f32 %v334, %v343
    %v346 = vadd.f32 %v335, %v343
    %v347 = vadd.f32 %v336, %v343
    %v348 = vadd.f32 %v337, %v343
    %349 = vst [vmem:[%s7] sm:$0xff] %v345
    %350 = vst [vmem:[%s7 + $0x8] sm:$0xff] %v346
    %351 = vst [vmem:[%s7 + $0x10] sm:$0xff] %v347
    %352 = vst [vmem:[%s7 + $0x18] sm:$0xff] %v348
  $region37: #{metric_conv.1} parent=0 // pred_fallthru
    _
  // Predicated region
  $region38: #{metric_conv.1} parent=0 // pred_check
    _
  $region39: #{metric_conv.1} parent=0 // pred_check_branch
    %354 = sbr.rel (0) target = $region41
  $region40: #{metric_conv.1} parent=0 // pred_region
    _
  $region41: #{metric_conv.1} parent=0 // pred_fallthru
    _
  // Predicated region
  $region42: #{metric_conv.1} parent=0 // pred_check
    _
  $region43: #{metric_conv.1} parent=0 // pred_check_branch
    %356 = sbr.rel (0) target = $region45
  $region44: #{metric_conv.1} parent=0 // pred_region
    _
  $region45: #{metric_conv.1} parent=0 // pred_fallthru
    _

</llo_original>
